<compile_context>
chip_gen: v7x
topology: tpu7x:2x2x1
jax: 0.10.0
libtpu: 0.0.40
codegen_flags: <defaults>
</compile_context>

<pallas_src>
import functools

import jax
import jax.numpy as jnp
from jax.experimental import pallas as pl
from jax.experimental.pallas import tpu as pltpu

LN_EPS = 1e-5  # torch.nn.LayerNorm default


def _round_up(x, m):
    return ((x + m - 1) // m) * m


def _vmem_capacity_bytes():
    # Queried lazily (inside the wrapper, at trace time) so an uninitialized
    # device at import time doesn't pin v5e/v6e (128 MiB) to a 64 MiB fallback.
    try:
        return int(pltpu.get_tpu_info().vmem_capacity_bytes)
    except Exception:
        return 64 * 1024 * 1024  # conservative fallback (v7x per-core VMEM)


def _prenorm_linear_kernel(x_ref, g_ref, b_ref, w_ref, wb_ref, o_ref, xn_ref, *,
                           d_true):
    """Grid = (row_blocks, col_blocks), cols inner.

    LayerNorm of the (tm, d_pad) row panel is computed once per row block
    (at col block 0) into the xn_ref VMEM scratch (weight dtype -> bf16 MXU
    fast path), then reused for every output-column block of that row panel.
    """
    j = pl.program_id(1)

    @pl.when(j == 0)
    def _():
        x = x_ref[...].astype(jnp.float32)                      # (tm, d_pad)
        # Single-pass LayerNorm statistics in f32.  Padded feature lanes are
        # zero, so they contribute nothing to either sum; divisor is the true
        # feature dim (biased variance, like torch.nn.LayerNorm).
        inv_d = jnp.float32(1.0 / d_true)
        mu = jnp.sum(x, axis=-1, keepdims=True) * inv_d
        ex2 = jnp.sum(x * x, axis=-1, keepdims=True) * inv_d
        var = jnp.maximum(ex2 - mu * mu, 0.0)                   # guard cancellation
        inv = jax.lax.rsqrt(var + LN_EPS)
        scale = inv * g_ref[...].astype(jnp.float32)            # per-row * per-feature
        shift = b_ref[...].astype(jnp.float32) - mu * scale
        # Padded lanes stay exactly zero (gamma/beta padded with zeros).
        xn_ref[...] = (x * scale + shift).astype(xn_ref.dtype)

    # fn: Linear on the MXU.  Operands in the weight's dtype (bf16 fast path
    # when weights are bf16), accumulation in f32.
    y = jnp.dot(xn_ref[...], w_ref[...], preferred_element_type=jnp.float32)
    y = y + wb_ref[...].astype(jnp.float32)
    o_ref[...] = y.astype(o_ref.dtype)


@functools.partial(jax.jit, static_argnames=("row_tile", "col_tile"))
def prenorm_forward(x, gamma, beta, w, wb, *, row_tile=256, col_tile=None):
    """x: (B, S, D) -> (B, S, Dout).  gamma/beta: (D,), w: (D, Dout), wb: (Dout,)."""
    B, S, D = x.shape
    Dout = w.shape[1]
    N = B * S

    itx = jnp.dtype(x.dtype).itemsize
    itw = jnp.dtype(w.dtype).itemsize
    vmem_cap = _vmem_capacity_bytes()

    # Native sublane packing: f32 -> 8, bf16 -> 16, int8/fp8 -> 32 rows.
    sub = {4: 8, 2: 16, 1: 32}.get(itx, 8)

    d_pad = _round_up(D, 128)          # lane-dense feature dim
    dout_pad = _round_up(Dout, 128)    # lane-dense output dim

    # ---- Row tile: large & sublane-aligned.  No row padding of x: a ragged
    # last row block (or a whole-array block when N is small) is handled by
    # Pallas boundary masking — boundary rows are row-independent garbage that
    # is never stored.
    row_tile = max(sub, _round_up(row_tile, sub))
    tm = N if N <= row_tile else row_tile

    # ---- Col tile: derived from a VMEM budget for the streamed weight slice
    # (double-buffered whenever there is more than one column block), instead
    # of a flat 2048 cap.  Keeps v7x (64 MiB) from colliding with the x/out
    # double buffers.
    if col_tile is not None:
        tn = min(max(128, _round_up(col_tile, 128)), dout_pad)
    else:
        tn = min(dout_pad, 2048)
        w_budget = vmem_cap // 4       # weight slice + its double buffer <= ~25% VMEM
        while tn > 256 and 2 * d_pad * tn * itw > w_budget:
            tn = _round_up(tn // 2, 128)

    def working_set(tm_, tn_):
        wbuf = 2 if pl.cdiv(dout_pad, tn_) > 1 else 1
        return (2 * tm_ * d_pad * itx                 # x row panel (double buffered)
                + 2 * tm_ * tn_ * itx                 # out tile (double buffered)
                + wbuf * d_pad * tn_ * itw            # weight slice
                + tm_ * d_pad * itw                   # xn VMEM scratch
                + 4 * tm_ * max(d_pad, tn_) * 4       # f32 LN / matmul intermediates
                + 2 * d_pad * 4 + wbuf * tn_ * 4)     # gamma / beta / bias

    # ---- Fit the working set under ~3/4 of physical VMEM by shrinking tiles
    # (tm first — cheap for the MXU; tn only as a last resort, keeping >= 256
    # to fill the 256-wide MXU on v6e/v7x) rather than only clamping the limit.
    budget = (vmem_cap * 3) // 4
    while working_set(tm, tn) > budget:
        if tm >= 2 * sub:
            tm = _round_up(tm // 2, sub)
        elif tn > 256:
            tn = _round_up(tn // 2, 128)
        elif tn > 128:
            tn = 128
        else:
            break

    n_row_blocks = pl.cdiv(N, tm)
    n_col_blocks = pl.cdiv(dout_pad, tn)
    dout_full = n_col_blocks * tn

    # ---- Feature-axis zero padding only where required (LN reduction and the
    # matmul K dim).  When D and Dout are already 128-multiples there is no
    # extra pass over x / w at all.
    x2 = x.reshape(N, D)
    g2 = gamma.reshape(1, D)
    b2 = beta.reshape(1, D)
    if d_pad != D:
        x2 = jnp.pad(x2, ((0, 0), (0, d_pad - D)))
        g2 = jnp.pad(g2, ((0, 0), (0, d_pad - D)))
        b2 = jnp.pad(b2, ((0, 0), (0, d_pad - D)))
    if d_pad != D or dout_full != Dout:
        w2 = jnp.pad(w, ((0, d_pad - D), (0, dout_full - Dout)))
    else:
        w2 = w
    wb2 = wb.reshape(1, Dout)
    if dout_full != Dout:
        wb2 = jnp.pad(wb2, ((0, 0), (0, dout_full - Dout)))

    est = working_set(tm, tn)
    vmem_limit = int(min(max(32 * 1024 * 1024, est * 3 // 2 + (2 << 20)), budget))

    # Weight / bias: single-buffered when fully resident (one col block),
    # double-buffered when streamed across the inner col axis.
    w_mode = pl.Buffered(1) if n_col_blocks == 1 else pl.Buffered(2)

    kernel = functools.partial(_prenorm_linear_kernel, d_true=D)

    out = pl.pallas_call(
        kernel,
        out_shape=jax.ShapeDtypeStruct((N, dout_full), x.dtype),
        grid_spec=pltpu.PrefetchScalarGridSpec(
            num_scalar_prefetch=0,
            # Rows OUTER, cols INNER: x (and its LayerNorm, cached in the xn
            # scratch) is fetched/computed once per row block and reused for
            # every output-column block; the weight slice streams on the inner
            # axis.  The inner axis must be sequential ("arbitrary") because of
            # the scratch carry.
            grid=(n_row_blocks, n_col_blocks),
            in_specs=[
                pl.BlockSpec((tm, d_pad), lambda i, j: (i, 0)),             # x rows
                pl.BlockSpec((1, d_pad), lambda i, j: (0, 0),
                             pipeline_mode=pl.Buffered(1)),                 # gamma
                pl.BlockSpec((1, d_pad), lambda i, j: (0, 0),
                             pipeline_mode=pl.Buffered(1)),                 # beta
                pl.BlockSpec((d_pad, tn), lambda i, j: (0, j),
                             pipeline_mode=w_mode),                         # fn weight
                pl.BlockSpec((1, tn), lambda i, j: (0, j),
                             pipeline_mode=w_mode),                         # fn bias
            ],
            out_specs=pl.BlockSpec((tm, tn), lambda i, j: (i, j)),
            scratch_shapes=[pltpu.VMEM((tm, d_pad), w.dtype)],              # cached xn
        ),
        compiler_params=pltpu.CompilerParams(
            dimension_semantics=("parallel", "arbitrary"),
            vmem_limit_bytes=vmem_limit),
    )(x2, g2, b2, w2, wb2)

    if dout_full != Dout:
        out = out[:, :Dout]
    return out.reshape(B, S, Dout)


def prenorm_reference(x, gamma, beta, w, wb):
    """Pure-JAX reference mirroring torch: fn(LayerNorm(x)) with fn = Linear."""
    xf = x.astype(jnp.float32)
    mu = jnp.mean(xf, axis=-1, keepdims=True)
    var = jnp.mean((xf - mu) ** 2, axis=-1, keepdims=True)
    xn = (xf - mu) * jax.lax.rsqrt(var + LN_EPS) * gamma.astype(jnp.float32) \
         + beta.astype(jnp.float32)
    y = xn @ w.astype(jnp.float32) + wb.astype(jnp.float32)
    return y.astype(x.dtype)


if __name__ == "__main__":
    # Small shapes consistent with the module: (batch=2, seq=8, dim=32).
    B, S, D = 2, 8, 32
    key = jax.random.PRNGKey(0)
    kx, kw, kb, kg, kbe = jax.random.split(key, 5)

    x = jax.random.normal(kx, (B, S, D), dtype=jnp.float32)
    gamma = 1.0 + 0.1 * jax.random.normal(kg, (D,), dtype=jnp.float32)
    beta = 0.1 * jax.random.normal(kbe, (D,), dtype=jnp.float32)
    w = 0.02 * jax.random.normal(kw, (D, D), dtype=jnp.float32)
    wb = 0.02 * jax.random.normal(kb, (D,), dtype=jnp.float32)

    # f32 path (mirrors the torch module numerics; single-pass variance in f32).
    out = jax.block_until_ready(prenorm_forward(x, gamma, beta, w, wb))
    ref = prenorm_reference(x, gamma, beta, w, wb)
    assert out.shape == (B, S, D)
    assert jnp.allclose(out, ref, atol=1e-4, rtol=1e-4), "f32 mismatch vs reference"

    # bf16 path (bf16 MXU operands, f32 accumulation) — looser tolerance.
    # NOTE: the kernel casts the normalized activations to bf16 before the MXU
    # while the reference matmuls in f32; this is a deliberate numerics gap.
    xb = x.astype(jnp.bfloat16)
    out_bf = jax.block_until_ready(
        prenorm_forward(xb, gamma.astype(jnp.bfloat16), beta.astype(jnp.bfloat16),
                        w.astype(jnp.bfloat16), wb.astype(jnp.bfloat16)))
    ref_bf = prenorm_reference(xb, gamma.astype(jnp.bfloat16),
                               beta.astype(jnp.bfloat16),
                               w.astype(jnp.bfloat16), wb.astype(jnp.bfloat16))
    assert jnp.allclose(out_bf.astype(jnp.float32), ref_bf.astype(jnp.float32),
                        atol=5e-2, rtol=5e-2), "bf16 mismatch vs reference"

    print("KERNEL_OK")
</pallas_src>

<mosaic_0001>
module attributes {stable_mosaic.version = 11 : i64} {
  func.func @_prenorm_linear_kernel(%arg0: i32, %arg1: i32, %arg2: memref<16x128xf32, #tpu.memory_space<vmem>>, %arg3: memref<1x128xf32, #tpu.memory_space<vmem>>, %arg4: memref<1x128xf32, #tpu.memory_space<vmem>>, %arg5: memref<128x128xf32, #tpu.memory_space<vmem>>, %arg6: memref<1x128xf32, #tpu.memory_space<vmem>>, %arg7: memref<16x128xf32, #tpu.memory_space<vmem>>, %arg8: memref<16x128xf32, #tpu.memory_space<vmem>>) attributes {dimension_semantics = [#tpu.dimension_semantics<parallel>, #tpu.dimension_semantics<arbitrary>], iteration_bounds = array<i64: 1, 1>, scalar_prefetch = 0 : i64, scratch_operands = 1 : i64, tpu.core_type = #tpu.core_type<tc>, window_params = [{transform_indices = @transform_0, window_bounds = array<i64: 16, 128>}, {pipeline_mode = #tpu.pipeline_mode<synchronous>, transform_indices = @transform_1, window_bounds = array<i64: 1, 128>}, {pipeline_mode = #tpu.pipeline_mode<synchronous>, transform_indices = @transform_2, window_bounds = array<i64: 1, 128>}, {pipeline_mode = #tpu.pipeline_mode<synchronous>, transform_indices = @transform_3, window_bounds = array<i64: 128, 128>}, {pipeline_mode = #tpu.pipeline_mode<synchronous>, transform_indices = @transform_4, window_bounds = array<i64: 1, 128>}, {transform_indices = @transform_5, window_bounds = array<i64: 16, 128>}]} {
    %c0_i32 = arith.constant 0 : i32
    %0 = arith.cmpi eq, %arg1, %c0_i32 : i32
    %1 = arith.extui %0 : i1 to i32
    %c0_i32_0 = arith.constant 0 : i32
    %2 = arith.cmpi ne, %1, %c0_i32_0 : i32
    scf.if %2 {
      %c0_8 = arith.constant 0 : index
      %c0_9 = arith.constant 0 : index
      %10 = vector.load %arg2[%c0_8, %c0_9] : memref<16x128xf32, #tpu.memory_space<vmem>>, vector<16x128xf32>
      %cst_10 = arith.constant dense<0.000000e+00> : vector<16xf32>
      %11 = vector.multi_reduction <add>, %10, %cst_10 [1] : vector<16x128xf32> to vector<16xf32>
      %12 = vector.shape_cast %11 : vector<16xf32> to vector<16x1xf32>
      %cst_11 = arith.constant 3.125000e-02 : f32
      %13 = vector.broadcast %cst_11 : f32 to vector<16x1xf32>
      %14 = arith.mulf %12, %13 : vector<16x1xf32>
      %15 = arith.mulf %10, %10 : vector<16x128xf32>
      %cst_12 = arith.constant dense<0.000000e+00> : vector<16xf32>
      %16 = vector.multi_reduction <add>, %15, %cst_12 [1] : vector<16x128xf32> to vector<16xf32>
      %17 = vector.shape_cast %16 : vector<16xf32> to vector<16x1xf32>
      %cst_13 = arith.constant 3.125000e-02 : f32
      %18 = vector.broadcast %cst_13 : f32 to vector<16x1xf32>
      %19 = arith.mulf %17, %18 : vector<16x1xf32>
      %20 = arith.mulf %14, %14 : vector<16x1xf32>
      %21 = arith.subf %19, %20 : vector<16x1xf32>
      %cst_14 = arith.constant 0.000000e+00 : f32
      %22 = vector.broadcast %cst_14 : f32 to vector<16x1xf32>
      %23 = arith.maximumf %21, %22 : vector<16x1xf32>
      %cst_15 = arith.constant 9.99999974E-6 : f32
      %24 = vector.broadcast %cst_15 : f32 to vector<16x1xf32>
      %25 = arith.addf %23, %24 : vector<16x1xf32>
      %26 = math.rsqrt %25 : vector<16x1xf32>
      %c0_16 = arith.constant 0 : index
      %c0_17 = arith.constant 0 : index
      %27 = vector.load %arg3[%c0_16, %c0_17] : memref<1x128xf32, #tpu.memory_space<vmem>>, vector<1x128xf32>
      %28 = vector.broadcast %26 : vector<16x1xf32> to vector<16x128xf32>
      %29 = vector.broadcast %27 : vector<1x128xf32> to vector<16x128xf32>
      %30 = arith.mulf %28, %29 : vector<16x128xf32>
      %c0_18 = arith.constant 0 : index
      %c0_19 = arith.constant 0 : index
      %31 = vector.load %arg4[%c0_18, %c0_19] : memref<1x128xf32, #tpu.memory_space<vmem>>, vector<1x128xf32>
      %32 = vector.broadcast %14 : vector<16x1xf32> to vector<16x128xf32>
      %33 = arith.mulf %32, %30 : vector<16x128xf32>
      %34 = vector.broadcast %31 : vector<1x128xf32> to vector<16x128xf32>
      %35 = arith.subf %34, %33 : vector<16x128xf32>
      %36 = arith.mulf %10, %30 : vector<16x128xf32>
      %37 = arith.addf %36, %35 : vector<16x128xf32>
      %c0_20 = arith.constant 0 : index
      %c0_21 = arith.constant 0 : index
      %38 = vector.load %arg8[%c0_20, %c0_21] : memref<16x128xf32, #tpu.memory_space<vmem>>, vector<16x128xf32>
      tpu.vector_store %arg8[%c0_20, %c0_21], %37 {strides = array<i32>} : memref<16x128xf32, #tpu.memory_space<vmem>>, vector<16x128xf32>,
    } else {
    }
    %c0 = arith.constant 0 : index
    %c0_1 = arith.constant 0 : index
    %3 = vector.load %arg8[%c0, %c0_1] : memref<16x128xf32, #tpu.memory_space<vmem>>, vector<16x128xf32>
    %c0_2 = arith.constant 0 : index
    %c0_3 = arith.constant 0 : index
    %4 = vector.load %arg5[%c0_2, %c0_3] : memref<128x128xf32, #tpu.memory_space<vmem>>, vector<128x128xf32>
    %cst = arith.constant dense<0.000000e+00> : vector<16x128xf32>
    %5 = tpu.matmul %3, %4, %cst {dimension_numbers = #tpu.dot_dimension_numbers<[1], [0], [0], [1], [0, 0, 1, 1], [], []>} : vector<16x128xf32>, vector<128x128xf32>, vector<16x128xf32> -> vector<16x128xf32>
    %c0_4 = arith.constant 0 : index
    %c0_5 = arith.constant 0 : index
    %6 = vector.load %arg6[%c0_4, %c0_5] : memref<1x128xf32, #tpu.memory_space<vmem>>, vector<1x128xf32>
    %7 = vector.broadcast %6 : vector<1x128xf32> to vector<16x128xf32>
    %8 = arith.addf %5, %7 : vector<16x128xf32>
    %c0_6 = arith.constant 0 : index
    %c0_7 = arith.constant 0 : index
    %9 = vector.load %arg7[%c0_6, %c0_7] : memref<16x128xf32, #tpu.memory_space<vmem>>, vector<16x128xf32>
    tpu.vector_store %arg7[%c0_6, %c0_7], %8 {strides = array<i32>} : memref<16x128xf32, #tpu.memory_space<vmem>>, vector<16x128xf32>,
    return
  }
  func.func @transform_0(%arg0: i32, %arg1: i32) -> (i32, i32) {
    %c0_i32 = arith.constant 0 : i32
    %c0_i32_0 = arith.constant 0 : i32
    return %arg0, %c0_i32 : i32, i32
  }
  func.func @transform_1(%arg0: i32, %arg1: i32) -> (i32, i32) {
    %c0_i32 = arith.constant 0 : i32
    %c0_i32_0 = arith.constant 0 : i32
    %c0_i32_1 = arith.constant 0 : i32
    return %c0_i32, %c0_i32_0 : i32, i32
  }
  func.func @transform_2(%arg0: i32, %arg1: i32) -> (i32, i32) {
    %c0_i32 = arith.constant 0 : i32
    %c0_i32_0 = arith.constant 0 : i32
    %c0_i32_1 = arith.constant 0 : i32
    return %c0_i32, %c0_i32_0 : i32, i32
  }
  func.func @transform_3(%arg0: i32, %arg1: i32) -> (i32, i32) {
    %c0_i32 = arith.constant 0 : i32
    %c0_i32_0 = arith.constant 0 : i32
    return %c0_i32, %arg1 : i32, i32
  }
  func.func @transform_4(%arg0: i32, %arg1: i32) -> (i32, i32) {
    %c0_i32 = arith.constant 0 : i32
    %c0_i32_0 = arith.constant 0 : i32
    return %c0_i32, %arg1 : i32, i32
  }
  func.func @transform_5(%arg0: i32, %arg1: i32) -> (i32, i32) {
    %c0_i32 = arith.constant 0 : i32
    return %arg0, %arg1 : i32, i32
  }
}

</mosaic_0001>

<llo_original>
// kernel: prenorm_forward.1
$region0: #{prenorm_forward.1}
  #allocation0 [shape = 'u32[]', space=smem, size = 0x4, offset = 0x4, fixed_abs, tag = 'smem constant byte address 0x4 - core index']
  #allocation1 [shape = 'u32[144,128]{1,0:T(1,128)}', space=vmem, size = 0x12000, scoped, tag = 'internal scratch']
  #allocation2 [shape = 'f32[16,128]{1,0:T(8,128)}', space=vmem, size = 0x2000, scoped, tag = 'scratch operand']
  %s0 = inlined_call_operand.vmem [shape: f32[16,128], index: 0, kind: input, shape index: {}]
  %s1 = inlined_call_operand.vmem [shape: f32[1,128], index: 1, kind: input, shape index: {}]
  %s2 = inlined_call_operand.vmem [shape: f32[1,128], index: 2, kind: input, shape index: {}]
  %s3 = inlined_call_operand.vmem [shape: f32[128,128], index: 3, kind: input, shape index: {}]
  %s4 = inlined_call_operand.vmem [shape: f32[1,128], index: 4, kind: input, shape index: {}]
  %s5 = inlined_call_operand.vmem [shape: f32[16,128], index: 5, kind: output, shape index: {}]
  %s6 = sld [smem:[#allocation0]]
  $region34: #{prenorm_forward.1} parent=0
    _
  %s8 = ssub.s32 1, %s6
  %s9 = scalar_select 0, %s8, %s6
  // Predicated region
  $region2: #{prenorm_forward.1} parent=0 // pred_check
    _
  $region3: #{prenorm_forward.1} parent=0 // pred_check_branch
    %11 = sbr.rel (0) target = $region5
  $region4: #{prenorm_forward.1} parent=0 // pred_region
    _
  $region5: #{prenorm_forward.1} parent=0 // pred_fallthru
    _
  // Predicated region
  $region6: #{prenorm_forward.1} parent=0 // pred_check
    _
  $region7: #{prenorm_forward.1} parent=0 // pred_check_branch
    %13 = sbr.rel (0) target = $region9
  $region8: #{prenorm_forward.1} parent=0 // pred_region
    _
  $region9: #{prenorm_forward.1} parent=0 // pred_fallthru
    _
  // Predicated region
  $region10: #{prenorm_forward.1} parent=0 // pred_check
    _
  $region11: #{prenorm_forward.1} parent=0 // pred_check_branch
    %15 = sbr.rel (0) target = $region13
  $region12: #{prenorm_forward.1} parent=0 // pred_region
    _
  $region13: #{prenorm_forward.1} parent=0 // pred_fallthru
    _
  // Predicated region
  $region14: #{prenorm_forward.1} parent=0 // pred_check
    _
  $region15: #{prenorm_forward.1} parent=0 // pred_check_branch
    %17 = sbr.rel (0) target = $region17
  $region16: #{prenorm_forward.1} parent=0 // pred_region
    _
  $region17: #{prenorm_forward.1} parent=0 // pred_fallthru
    _
  // Predicated region
  $region18: #{prenorm_forward.1} parent=0 // pred_check
    _
  $region19: #{prenorm_forward.1} parent=0 // pred_check_branch
    %19 = sbr.rel (0) target = $region21
  $region20: #{prenorm_forward.1} parent=0 // pred_region
    _
  $region21: #{prenorm_forward.1} parent=0 // pred_fallthru
    _
  %p20 = scmp.eq.s32.totalorder 0, 0
  // Predicated region
  $region22: #{prenorm_forward.1} parent=0 // pred_check
    %p21 = pneg %p20
  $region23: #{prenorm_forward.1} parent=0 // pred_check_branch
    %23 = sbr.rel (%p21) target = $region25
  $region24: #{prenorm_forward.1} parent=0 // pred_region
    %v24 = vld [vmem:[%s0] sm:$0xff]
    %v25 = vld [vmem:[%s0 + $0x8] sm:$0xff]
    %26 = vadd.xlane.f32.xlu0 %v24
    %v27 = vpop.xlane.xlu0 %26
    %28 = vadd.xlane.f32.xlu0 %v25
    %v29 = vpop.xlane.xlu0 %28
    %v30 = vmul.f32 %v27, 0.03125
    %v31 = vmul.f32 %v29, 0.03125
    %v32 = vmul.f32 %v24, %v24
    %v33 = vmul.f32 %v25, %v25
    %34 = vadd.xlane.f32.xlu0 %v32
    %v35 = vpop.xlane.xlu0 %34
    %36 = vadd.xlane.f32.xlu0 %v33
    %v37 = vpop.xlane.xlu0 %36
    %v38 = vmul.f32 %v35, 0.03125
    %v39 = vmul.f32 %v37, 0.03125
    %v40 = vmul.f32 %v30, %v30
    %v41 = vmul.f32 %v31, %v31
    %v42 = vsub.f32 %v38, %v40
    %v43 = vsub.f32 %v39, %v41
    %v44 = vmax.f32 %v42, 0.0
    %v45 = vmax.f32 %v43, 0.0
    %v46 = vadd.f32 %v44, 1e-05
    %v47 = vadd.f32 %v45, 1e-05
    %v48 = vrsqrt.pop %v46
    %v49 = vrsqrt.pop %v47
    %v50 = vld [vmem:[%s1] sm:$0x1]
    %v52 = vlaneseq
    %v53 = vshrl.u32 %v52, 7
    %v54 = vsub.s32 0, %v53
    %v55 = vrot.slane %v50, %v54
    %v57 = vmul.f32 %v48, %v55
    %v58 = vmul.f32 %v49, %v55
    %v59 = vld [vmem:[%s2] sm:$0x1]
    %v60 = vmul.f32 %v30, %v57
    %v61 = vmul.f32 %v31, %v58
    %v63 = vlaneseq
    %v64 = vshrl.u32 %v63, 7
    %v65 = vsub.s32 0, %v64
    %v66 = vrot.slane %v59, %v65
    %v68 = vsub.f32 %v66, %v60
    %v69 = vsub.f32 %v66, %v61
    %v70 = vmul.f32 %v24, %v57
    %v71 = vmul.f32 %v25, %v58
    %v72 = vadd.f32 %v70, %v68
    %v73 = vadd.f32 %v71, %v69
    %74 = vst [vmem:[#allocation2] sm:$0xff] %v72
    %75 = vst [vmem:[#allocation2 + $0x8] sm:$0xff] %v73
  $region25: #{prenorm_forward.1} parent=0 // pred_fallthru
    _
  %v76 = vld [vmem:[#allocation2] sm:$0xff]
  %v77 = vld [vmem:[#allocation2 + $0x8] sm:$0xff]
  %v78 = vld [vmem:[%s3] sm:$0xff]
  %v79 = vld [vmem:[%s3 + $0x8] sm:$0xff]
  %v80 = vld [vmem:[%s3 + $0x10] sm:$0xff]
  %v81 = vld [vmem:[%s3 + $0x18] sm:$0xff]
  %v82 = vld [vmem:[%s3 + $0x20] sm:$0xff]
  %v83 = vld [vmem:[%s3 + $0x28] sm:$0xff]
  %v84 = vld [vmem:[%s3 + $0x30] sm:$0xff]
  %v85 = vld [vmem:[%s3 + $0x38] sm:$0xff]
  %v86 = vld [vmem:[%s3 + $0x40] sm:$0xff]
  %v87 = vld [vmem:[%s3 + $0x48] sm:$0xff]
  %v88 = vld [vmem:[%s3 + $0x50] sm:$0xff]
  %v89 = vld [vmem:[%s3 + $0x58] sm:$0xff]
  %v90 = vld [vmem:[%s3 + $0x60] sm:$0xff]
  %v91 = vld [vmem:[%s3 + $0x68] sm:$0xff]
  %v92 = vld [vmem:[%s3 + $0x70] sm:$0xff]
  %v93 = vld [vmem:[%s3 + $0x78] sm:$0xff]
  %v94 = vld [vmem:[%s4] sm:$0x1]
  %v96 = vlaneseq
  %v97 = vshrl.u32 %v96, 7
  %v98 = vsub.s32 0, %v97
  %v99 = vrot.slane %v94, %v98
  %101 = vmatprep.subr.mxu0 0.0
  %102 = vmatpush1.msra.mxu0 %v78
  %103 = vmatprep.subr.mxu0 0.0
  %104 = vmatpush1.msra.mxu0 %v79
  %105 = vmatprep.subr.mxu0 0.0
  %106 = vmatpush1.msra.mxu0 %v80
  %107 = vmatprep.subr.mxu0 0.0
  %108 = vmatpush1.msra.mxu0 %v81
  %109 = vmatprep.subr.mxu0 0.0
  %110 = vmatpush1.msra.mxu0 %v82
  %111 = vmatprep.subr.mxu0 0.0
  %112 = vmatpush1.msra.mxu0 %v83
  %113 = vmatprep.subr.mxu0 0.0
  %114 = vmatpush1.msra.mxu0 %v84
  %115 = vmatprep.subr.mxu0 0.0
  %116 = vmatpush1.msra.mxu0 %v85
  %117 = vmatprep.subr.mxu0 0.0
  %118 = vmatpush1.msra.mxu0 %v86
  %119 = vmatprep.subr.mxu0 0.0
  %120 = vmatpush1.msra.mxu0 %v87
  %121 = vmatprep.subr.mxu0 0.0
  %122 = vmatpush1.msra.mxu0 %v88
  %123 = vmatprep.subr.mxu0 0.0
  %124 = vmatpush1.msra.mxu0 %v89
  %125 = vmatprep.subr.mxu0 0.0
  %126 = vmatpush1.msra.mxu0 %v90
  %127 = vmatprep.subr.mxu0 0.0
  %128 = vmatpush1.msra.mxu0 %v91
  %129 = vmatprep.subr.mxu0 0.0
  %130 = vmatpush1.msra.mxu0 %v92
  %131 = vmatprep.subr.mxu0 0.0
  %132 = vmatpush1.msra.mxu0 %v93
  %133 = vmatprep.subr.mxu0 0.0
  %134 = vmatpush1.msra.mxu0 0.0
  %135 = vmatprep.subr.mxu0 0.0
  %136 = vmatpush1.msra.mxu0 0.0
  %137 = vmatprep.subr.mxu0 0.0
  %138 = vmatpush1.msra.mxu0 0.0
  %139 = vmatprep.subr.mxu0 0.0
  %140 = vmatpush1.msra.mxu0 0.0
  %141 = vmatprep.subr.mxu0 0.0
  %142 = vmatpush1.msra.mxu0 0.0
  %143 = vmatprep.subr.mxu0 0.0
  %144 = vmatpush1.msra.mxu0 0.0
  %145 = vmatprep.subr.mxu0 0.0
  %146 = vmatpush1.msra.mxu0 0.0
  %147 = vmatprep.subr.mxu0 0.0
  %148 = vmatpush1.msra.mxu0 0.0
  %149 = vmatprep.subr.mxu0 0.0
  %150 = vmatpush1.msra.mxu0 0.0
  %151 = vmatprep.subr.mxu0 0.0
  %152 = vmatpush1.msra.mxu0 0.0
  %153 = vmatprep.subr.mxu0 0.0
  %154 = vmatpush1.msra.mxu0 0.0
  %155 = vmatprep.subr.mxu0 0.0
  %156 = vmatpush1.msra.mxu0 0.0
  %157 = vmatprep.subr.mxu0 0.0
  %158 = vmatpush1.msra.mxu0 0.0
  %159 = vmatprep.subr.mxu0 0.0
  %160 = vmatpush1.msra.mxu0 0.0
  %161 = vmatprep.subr.mxu0 0.0
  %162 = vmatpush1.msra.mxu0 0.0
  %163 = vmatprep.subr.mxu0 0.0
  %164 = vmatpush1.msra.mxu0 0.0
  %165 = vmatprep.mubr.f32.mxu0 0.0
  %166 = vmatmul.mubr.f32.gmra.mrb[0].mxu0 %v76
  %v167 = vpop.f32.mrb[0].mxu0
  %v168 = vadd.f32 %v99, %v167
  %v169 = vpop.f32.mrb[0].mxu0
  %170 = vmatprep.mubr.f32.mxu0 0.0
  %171 = vmatmul.mubr.f32.gmra.mrb[0].mxu0 %v77
  %v172 = vpop.f32.mrb[0].mxu0
  %v173 = vadd.f32 %v99, %v172
  %v174 = vpop.f32.mrb[0].mxu0
  %175 = vdwg.mxu0
  %176 = vst [vmem:[%s5] sm:$0xff] %v168
  %177 = vst [vmem:[%s5 + $0x8] sm:$0xff] %v173
  // Predicated region
  $region26: #{prenorm_forward.1} parent=0 // pred_check
    _
  $region27: #{prenorm_forward.1} parent=0 // pred_check_branch
    %179 = sbr.rel (0) target = $region29
  $region28: #{prenorm_forward.1} parent=0 // pred_region
    _
  $region29: #{prenorm_forward.1} parent=0 // pred_fallthru
    _
  // Predicated region
  $region30: #{prenorm_forward.1} parent=0 // pred_check
    _
  $region31: #{prenorm_forward.1} parent=0 // pred_check_branch
    %181 = sbr.rel (0) target = $region33
  $region32: #{prenorm_forward.1} parent=0 // pred_region
    _
  $region33: #{prenorm_forward.1} parent=0 // pred_fallthru
    _

</llo_original>
